<compile_context>
chip_gen: v7x
topology: tpu7x:2x2x1
jax: 0.10.0
libtpu: 0.0.40
codegen_flags: <defaults>
</compile_context>

<pallas_src>
import jax
import jax.numpy as jnp
from jax.experimental import pallas as pl
from jax.experimental.pallas import tpu as pltpu

HID = 8              # hidden width of each branch
H2 = 2 * HID + 1     # fused hidden: [mean branch | log_std branch | constant-1 channel]
OUT_PAD = 128        # lane-dense fused output width (mean|log_std in the first 2A lanes)


def _round_up(n, m):
    return ((n + m - 1) // m) * m


def robot_actor_kernel(x_ref, w1_ref, b1_ref, w2_ref, out_ref):
    # x_ref  : (tile_b, 3)
    # w1_ref : (3, 17)       [w1 | w1s | 0-col]
    # b1_ref : (1, 17)       [b1 | b1s | 1]   -> ReLU keeps hidden col 16 == 1
    # w2_ref : (17, 128)     rows 0:16 = blockdiag(w2, w2s), row 16 = [b2 | b2s], zero-padded lanes
    # out_ref: (tile_b, 128) lane-dense fused [mean | log_std | 0 ...]
    h = jnp.maximum(
        jnp.dot(x_ref[...], w1_ref[...], preferred_element_type=jnp.float32)
        + b1_ref[...],
        0.0)
    out_ref[...] = jnp.dot(h, w2_ref[...], preferred_element_type=jnp.float32)


def robot_actor_batched(x, packed, *, tile_b=256):
    """Full-batch forward. Returns (mean, log_std), each of shape (B, actions)."""
    w1_big = packed["w1_big"]
    b1_big = packed["b1_big"]
    w2_big = packed["w2_big"]
    actions = packed["actions"]

    x = x.astype(jnp.float32)
    B = x.shape[0]

    tile_b = min(tile_b, _round_up(B, 8))          # small batches -> single full block
    b_pad = _round_up(B, tile_b)
    if b_pad != B:
        x = jnp.pad(x, ((0, b_pad - B), (0, 0)))   # padded rows are computed and discarded

    grid = (b_pad // tile_b,)
    out = pl.pallas_call(
        robot_actor_kernel,
        out_shape=jax.ShapeDtypeStruct((b_pad, OUT_PAD), jnp.float32),
        grid=grid,
        in_specs=[
            pl.BlockSpec((tile_b, 3), lambda i: (i, 0)),   # batch-tiled activations
            pl.BlockSpec((3, H2), lambda i: (0, 0)),       # weights pinned (constant index_map)
            pl.BlockSpec((1, H2), lambda i: (0, 0)),
            pl.BlockSpec((H2, OUT_PAD), lambda i: (0, 0)),
        ],
        out_specs=pl.BlockSpec((tile_b, OUT_PAD), lambda i: (i, 0)),
        compiler_params=pltpu.CompilerParams(
            dimension_semantics=("parallel",)),            # batch axis across TCs on v7x
    )(x, w1_big, b1_big, w2_big)

    return out[:B, :actions], out[:B, actions:2 * actions]


def robot_actor_forward(x, packed, *, tile_b=256):
    """Module-faithful forward: (network(x)[0], network_std(x)[0])."""
    mean, log_std = robot_actor_batched(x, packed, tile_b=tile_b)
    return mean[0], log_std[0]


def init_params(actions, key):
    """PyTorch nn.Linear-style U(-1/sqrt(in), 1/sqrt(in)) init.
    Weights stored as (in, out); biases as (1, out)."""
    keys = jax.random.split(key, 8)

    def lin(kw, kb, fan_in, fan_out):
        bound = 1.0 / jnp.sqrt(jnp.float32(fan_in))
        w = jax.random.uniform(kw, (fan_in, fan_out), jnp.float32, -bound, bound)
        b = jax.random.uniform(kb, (1, fan_out), jnp.float32, -bound, bound)
        return w, b

    w1, b1 = lin(keys[0], keys[1], 3, HID)
    w2, b2 = lin(keys[2], keys[3], HID, actions)
    w1s, b1s = lin(keys[4], keys[5], 3, HID)
    w2s, b2s = lin(keys[6], keys[7], HID, actions)
    return dict(w1=w1, b1=b1, w2=w2, b2=b2,
                w1s=w1s, b1s=b1s, w2s=w2s, b2s=b2s)


def pack_params(p):
    """One-time packing of the 8 raw tensors into 3 fused slabs (outside the kernel)."""
    actions = p["w2"].shape[1]
    assert 2 * actions <= OUT_PAD

    # First layer: (3, 17). Cols 0:8 mean branch, 8:16 log_std branch, col 16 zero.
    w1_big = jnp.zeros((3, H2), jnp.float32)
    w1_big = w1_big.at[:, :HID].set(p["w1"]).at[:, HID:2 * HID].set(p["w1s"])

    # First-layer bias: (1, 17), last entry 1 -> ReLU(1) = 1 constant channel.
    b1_big = jnp.zeros((1, H2), jnp.float32)
    b1_big = b1_big.at[:, :HID].set(p["b1"]).at[:, HID:2 * HID].set(p["b1s"])
    b1_big = b1_big.at[:, 2 * HID].set(1.0)

    # Second layer: (17, 128). blockdiag(w2, w2s) in rows 0:16, biases in row 16,
    # lanes 2A:128 stay zero (lane-dense output padding).
    w2_big = jnp.zeros((H2, OUT_PAD), jnp.float32)
    w2_big = w2_big.at[:HID, :actions].set(p["w2"])
    w2_big = w2_big.at[HID:2 * HID, actions:2 * actions].set(p["w2s"])
    w2_big = w2_big.at[2 * HID, :actions].set(p["b2"][0])
    w2_big = w2_big.at[2 * HID, actions:2 * actions].set(p["b2s"][0])

    return dict(w1_big=w1_big, b1_big=b1_big, w2_big=w2_big, actions=actions)


def _ref_full(x, p):
    """Pure-JAX reference mirroring the PyTorch module (full batch)."""
    h = jnp.maximum(x @ p["w1"] + p["b1"], 0.0)
    m = h @ p["w2"] + p["b2"]
    hs = jnp.maximum(x @ p["w1s"] + p["b1s"], 0.0)
    s = hs @ p["w2s"] + p["b2s"]
    return m, s


if __name__ == "__main__":
    actions = 4
    batch = 2

    key = jax.random.PRNGKey(0)
    kx, kp, kb = jax.random.split(key, 3)

    x = jax.random.normal(kx, (batch, 3), dtype=jnp.float32)
    raw_params = init_params(actions, kp)
    packed = pack_params(raw_params)

    # Module-faithful path (row 0 only, like the PyTorch forward).
    mean, log_std = robot_actor_forward(x, packed)
    jax.block_until_ready((mean, log_std))

    m_ref_full, s_ref_full = _ref_full(x, raw_params)
    assert mean.shape == (actions,) and log_std.shape == (actions,)
    assert jnp.allclose(mean, m_ref_full[0], atol=1e-5), "mean mismatch"
    assert jnp.allclose(log_std, s_ref_full[0], atol=1e-5), "log_std mismatch"

    # Batched path with a non-trivial grid (exercises tiling, padding, weight pinning).
    big_batch = 300
    xb = jax.random.normal(kb, (big_batch, 3), dtype=jnp.float32)
    mb, sb = robot_actor_batched(xb, packed, tile_b=256)
    jax.block_until_ready((mb, sb))

    mb_ref, sb_ref = _ref_full(xb, raw_params)
    assert mb.shape == (big_batch, actions) and sb.shape == (big_batch, actions)
    assert jnp.allclose(mb, mb_ref, atol=1e-5), "batched mean mismatch"
    assert jnp.allclose(sb, sb_ref, atol=1e-5), "batched log_std mismatch"

    print("KERNEL_OK")
</pallas_src>

<mosaic_0001>
module attributes {stable_mosaic.version = 11 : i64} {
  func.func @robot_actor_kernel(%arg0: i32, %arg1: memref<8x3xf32, #tpu.memory_space<vmem>>, %arg2: memref<3x17xf32, #tpu.memory_space<vmem>>, %arg3: memref<1x17xf32, #tpu.memory_space<vmem>>, %arg4: memref<17x128xf32, #tpu.memory_space<vmem>>, %arg5: memref<8x128xf32, #tpu.memory_space<vmem>>) attributes {dimension_semantics = [#tpu.dimension_semantics<parallel>], iteration_bounds = array<i64: 1>, scalar_prefetch = 0 : i64, scratch_operands = 0 : i64, tpu.core_type = #tpu.core_type<tc>, window_params = [{transform_indices = @transform_0, window_bounds = array<i64: 8, 3>}, {pipeline_mode = #tpu.pipeline_mode<synchronous>, transform_indices = @transform_1, window_bounds = array<i64: 3, 17>}, {pipeline_mode = #tpu.pipeline_mode<synchronous>, transform_indices = @transform_2, window_bounds = array<i64: 1, 17>}, {pipeline_mode = #tpu.pipeline_mode<synchronous>, transform_indices = @transform_3, window_bounds = array<i64: 17, 128>}, {transform_indices = @transform_4, window_bounds = array<i64: 8, 128>}]} {
    %c0 = arith.constant 0 : index
    %c0_0 = arith.constant 0 : index
    %0 = vector.load %arg1[%c0, %c0_0] : memref<8x3xf32, #tpu.memory_space<vmem>>, vector<8x3xf32>
    %c0_1 = arith.constant 0 : index
    %c0_2 = arith.constant 0 : index
    %1 = vector.load %arg2[%c0_1, %c0_2] : memref<3x17xf32, #tpu.memory_space<vmem>>, vector<3x17xf32>
    %cst = arith.constant dense<0.000000e+00> : vector<8x17xf32>
    %2 = tpu.matmul %0, %1, %cst {dimension_numbers = #tpu.dot_dimension_numbers<[1], [0], [0], [1], [0, 0, 1, 1], [], []>} : vector<8x3xf32>, vector<3x17xf32>, vector<8x17xf32> -> vector<8x17xf32>
    %c0_3 = arith.constant 0 : index
    %c0_4 = arith.constant 0 : index
    %3 = vector.load %arg3[%c0_3, %c0_4] : memref<1x17xf32, #tpu.memory_space<vmem>>, vector<1x17xf32>
    %4 = vector.broadcast %3 : vector<1x17xf32> to vector<8x17xf32>
    %5 = arith.addf %2, %4 : vector<8x17xf32>
    %cst_5 = arith.constant 0.000000e+00 : f32
    %6 = vector.broadcast %cst_5 : f32 to vector<8x17xf32>
    %7 = arith.maximumf %5, %6 : vector<8x17xf32>
    %c0_6 = arith.constant 0 : index
    %c0_7 = arith.constant 0 : index
    %8 = vector.load %arg4[%c0_6, %c0_7] : memref<17x128xf32, #tpu.memory_space<vmem>>, vector<17x128xf32>
    %cst_8 = arith.constant dense<0.000000e+00> : vector<8x128xf32>
    %9 = tpu.matmul %7, %8, %cst_8 {dimension_numbers = #tpu.dot_dimension_numbers<[1], [0], [0], [1], [0, 0, 1, 1], [], []>} : vector<8x17xf32>, vector<17x128xf32>, vector<8x128xf32> -> vector<8x128xf32>
    %c0_9 = arith.constant 0 : index
    %c0_10 = arith.constant 0 : index
    %10 = vector.load %arg5[%c0_9, %c0_10] : memref<8x128xf32, #tpu.memory_space<vmem>>, vector<8x128xf32>
    tpu.vector_store %arg5[%c0_9, %c0_10], %9 {strides = array<i32>} : memref<8x128xf32, #tpu.memory_space<vmem>>, vector<8x128xf32>,
    return
  }
  func.func @transform_0(%arg0: i32) -> (i32, i32) {
    %c0_i32 = arith.constant 0 : i32
    %c0_i32_0 = arith.constant 0 : i32
    return %arg0, %c0_i32 : i32, i32
  }
  func.func @transform_1(%arg0: i32) -> (i32, i32) {
    %c0_i32 = arith.constant 0 : i32
    %c0_i32_0 = arith.constant 0 : i32
    %c0_i32_1 = arith.constant 0 : i32
    return %c0_i32, %c0_i32_0 : i32, i32
  }
  func.func @transform_2(%arg0: i32) -> (i32, i32) {
    %c0_i32 = arith.constant 0 : i32
    %c0_i32_0 = arith.constant 0 : i32
    %c0_i32_1 = arith.constant 0 : i32
    return %c0_i32, %c0_i32_0 : i32, i32
  }
  func.func @transform_3(%arg0: i32) -> (i32, i32) {
    %c0_i32 = arith.constant 0 : i32
    %c0_i32_0 = arith.constant 0 : i32
    %c0_i32_1 = arith.constant 0 : i32
    return %c0_i32, %c0_i32_0 : i32, i32
  }
  func.func @transform_4(%arg0: i32) -> (i32, i32) {
    %c0_i32 = arith.constant 0 : i32
    %c0_i32_0 = arith.constant 0 : i32
    return %arg0, %c0_i32 : i32, i32
  }
}

</mosaic_0001>

<llo_original>
// kernel: tpu_custom_call.1
$region0: #{tpu_custom_call.1}
  #allocation0 [shape = 'u32[]', space=smem, size = 0x4, offset = 0x4, fixed_abs, tag = 'smem constant byte address 0x4 - core index']
  #allocation1 [shape = 'u32[144,128]{1,0:T(1,128)}', space=vmem, size = 0x12000, scoped, tag = 'internal scratch']
  %s0 = inlined_call_operand.vmem [shape: f32[8,3], index: 0, kind: input, shape index: {}]
  %s1 = inlined_call_operand.vmem [shape: f32[3,17], index: 1, kind: input, shape index: {}]
  %s2 = inlined_call_operand.vmem [shape: f32[1,17], index: 2, kind: input, shape index: {}]
  %s3 = inlined_call_operand.hbm [shape: f32[17,128], index: 3, kind: input, shape index: {}]
  %s4 = inlined_call_operand.hbm [shape: f32[8,128], index: 4, kind: output, shape index: {}]
  %s5 = sld [smem:[#allocation0]]
  $region30: #{tpu_custom_call.1} parent=0
    _
  %s7 = ssub.s32 1, %s5
  %s8 = scalar_select 0, %s7, %s5
  $region1: #{tpu_custom_call.1} parent=0
    #allocation2 [shape = 'u8[12288]{0}', space=vmem, size = 0x3000, scoped, tag = 'input window, operand 3, single buffered']
    #allocation3 [shape = 's32[1]{0}', space=sflag, size = 0x4, scoped, tag = 'scoped memory for tpu_custom_call.1']
    #allocation4 [shape = 's32[1]{0}', space=sflag, size = 0x4, scoped, tag = 'scoped memory for tpu_custom_call.1']
    #allocation5 [shape = 'u8[4096]{0}', space=vmem, size = 0x1000, scoped, tag = 'output window, operand 0, single buffered']
    %9 = vsyncpa [#allocation3], 0
    %10 = vsyncpa [#allocation4], 0
    // Predicated region
    $region2: #{tpu_custom_call.1} parent=1 // pred_check
      _
    $region3: #{tpu_custom_call.1} parent=1 // pred_check_branch
      %12 = sbr.rel (0) target = $region5
    $region4: #{tpu_custom_call.1} parent=1 // pred_region
      _
    $region5: #{tpu_custom_call.1} parent=1 // pred_fallthru
      _
    // Predicated region
    $region6: #{tpu_custom_call.1} parent=1 // pred_check
      _
    $region7: #{tpu_custom_call.1} parent=1 // pred_check_branch
      %14 = sbr.rel (0) target = $region9
    $region8: #{tpu_custom_call.1} parent=1 // pred_region
      _
    $region9: #{tpu_custom_call.1} parent=1 // pred_fallthru
      _
    // Predicated region
    $region10: #{tpu_custom_call.1} parent=1 // pred_check
      _
    $region11: #{tpu_custom_call.1} parent=1 // pred_check_branch
      %16 = sbr.rel (0) target = $region13
    $region12: #{tpu_custom_call.1} parent=1 // pred_region
      _
    $region13: #{tpu_custom_call.1} parent=1 // pred_fallthru
      _
    // Predicated region
    $region14: #{tpu_custom_call.1} parent=1 // pred_check
      _
    $region15: #{tpu_custom_call.1} parent=1 // pred_check_branch
      %18 = sbr.rel (0) target = $region17
    $region16: #{tpu_custom_call.1} parent=1 // pred_region
      %s20 = ssub.s32 384, 384
      %21 = vsyncadd [#allocation3], %s20
      %s22 = sshll.u32 [#allocation2], 4
      %s23 = int_to_ptr.vmem [resolvable:$true] %s22
      %28 = dma.hbm_to_vmem [thread:$0]  %s3, 384, %s23, [#allocation3], 128, 128, 8
    $region17: #{tpu_custom_call.1} parent=1 // pred_fallthru
      _
    // Predicated region
    $region18: #{tpu_custom_call.1} parent=1 // pred_check
      _
    $region19: #{tpu_custom_call.1} parent=1 // pred_check_branch
      %30 = sbr.rel (0) target = $region21
    $region20: #{tpu_custom_call.1} parent=1 // pred_region
      %31 = dma.done [#allocation3], 384
    $region21: #{tpu_custom_call.1} parent=1 // pred_fallthru
      _
    %v32 = vld [vmem:[%s0] sm:$0xff]
    %v33 = vld [vmem:[%s1] sm:$0x7]
    %v34 = vld [vmem:[%s2] sm:$0x1]
    %v36 = vlaneseq
    %v37 = vshrl.u32 %v36, 7
    %v38 = vsub.s32 0, %v37
    %v39 = vrot.slane %v34, %v38
    %vm41 = vcmask 23552
    %v43 = vsel %vm41, %v32, 0
    %vm45 = vcmask 1042432
    %v47 = vsel %vm45, %v33, 0
    %49 = vmatprep.subr.mxu0 0.0
    %50 = vmatpush1.msra.mxu0 %v47
    %51 = vmatprep.subr.mxu0 0.0
    %52 = vmatpush1.msra.mxu0 0.0
    %53 = vmatprep.subr.mxu0 0.0
    %54 = vmatpush1.msra.mxu0 0.0
    %55 = vmatprep.subr.mxu0 0.0
    %56 = vmatpush1.msra.mxu0 0.0
    %57 = vmatprep.subr.mxu0 0.0
    %58 = vmatpush1.msra.mxu0 0.0
    %59 = vmatprep.subr.mxu0 0.0
    %60 = vmatpush1.msra.mxu0 0.0
    %61 = vmatprep.subr.mxu0 0.0
    %62 = vmatpush1.msra.mxu0 0.0
    %63 = vmatprep.subr.mxu0 0.0
    %64 = vmatpush1.msra.mxu0 0.0
    %65 = vmatprep.subr.mxu0 0.0
    %66 = vmatpush1.msra.mxu0 0.0
    %67 = vmatprep.subr.mxu0 0.0
    %68 = vmatpush1.msra.mxu0 0.0
    %69 = vmatprep.subr.mxu0 0.0
    %70 = vmatpush1.msra.mxu0 0.0
    %71 = vmatprep.subr.mxu0 0.0
    %72 = vmatpush1.msra.mxu0 0.0
    %73 = vmatprep.subr.mxu0 0.0
    %74 = vmatpush1.msra.mxu0 0.0
    %75 = vmatprep.subr.mxu0 0.0
    %76 = vmatpush1.msra.mxu0 0.0
    %77 = vmatprep.subr.mxu0 0.0
    %78 = vmatpush1.msra.mxu0 0.0
    %79 = vmatprep.subr.mxu0 0.0
    %80 = vmatpush1.msra.mxu0 0.0
    %81 = vmatprep.subr.mxu0 0.0
    %82 = vmatpush1.msra.mxu0 0.0
    %83 = vmatprep.subr.mxu0 0.0
    %84 = vmatpush1.msra.mxu0 0.0
    %85 = vmatprep.subr.mxu0 0.0
    %86 = vmatpush1.msra.mxu0 0.0
    %87 = vmatprep.subr.mxu0 0.0
    %88 = vmatpush1.msra.mxu0 0.0
    %89 = vmatprep.subr.mxu0 0.0
    %90 = vmatpush1.msra.mxu0 0.0
    %91 = vmatprep.subr.mxu0 0.0
    %92 = vmatpush1.msra.mxu0 0.0
    %93 = vmatprep.subr.mxu0 0.0
    %94 = vmatpush1.msra.mxu0 0.0
    %95 = vmatprep.subr.mxu0 0.0
    %96 = vmatpush1.msra.mxu0 0.0
    %97 = vmatprep.subr.mxu0 0.0
    %98 = vmatpush1.msra.mxu0 0.0
    %99 = vmatprep.subr.mxu0 0.0
    %100 = vmatpush1.msra.mxu0 0.0
    %101 = vmatprep.subr.mxu0 0.0
    %102 = vmatpush1.msra.mxu0 0.0
    %103 = vmatprep.subr.mxu0 0.0
    %104 = vmatpush1.msra.mxu0 0.0
    %105 = vmatprep.subr.mxu0 0.0
    %106 = vmatpush1.msra.mxu0 0.0
    %107 = vmatprep.subr.mxu0 0.0
    %108 = vmatpush1.msra.mxu0 0.0
    %109 = vmatprep.subr.mxu0 0.0
    %110 = vmatpush1.msra.mxu0 0.0
    %111 = vmatprep.subr.mxu0 0.0
    %112 = vmatpush1.msra.mxu0 0.0
    %113 = vmatprep.mubr.f32.mxu0 0.0
    %114 = vmatmul.mubr.f32.gmra.mrb[0].mxu0 %v43
    %v115 = vpop.f32.mrb[0].mxu0
    %v116 = vadd.f32 %v39, %v115
    %v117 = vpop.f32.mrb[0].mxu0
    %118 = vdwg.mxu0
    %v119 = vmax.f32 %v116, 0.0
    %v120 = vld [vmem:[#allocation2] sm:$0xff]
    %v121 = vld [vmem:[#allocation2 + $0x8] sm:$0xff]
    %v122 = vld [vmem:[#allocation2 + $0x10] sm:$0x1]
    %vm123 = vcmask 138240
    %v125 = vsel %vm123, %v119, 0
    %vm127 = vcmask 1040384
    %v129 = vsel %vm127, %v122, 0
    %131 = vmatprep.subr.mxu0 0.0
    %132 = vmatpush1.msra.mxu0 %v120
    %133 = vmatprep.subr.mxu0 0.0
    %134 = vmatpush1.msra.mxu0 %v121
    %135 = vmatprep.subr.mxu0 0.0
    %136 = vmatpush1.msra.mxu0 %v129
    %137 = vmatprep.subr.mxu0 0.0
    %138 = vmatpush1.msra.mxu0 0.0
    %139 = vmatprep.subr.mxu0 0.0
    %140 = vmatpush1.msra.mxu0 0.0
    %141 = vmatprep.subr.mxu0 0.0
    %142 = vmatpush1.msra.mxu0 0.0
    %143 = vmatprep.subr.mxu0 0.0
    %144 = vmatpush1.msra.mxu0 0.0
    %145 = vmatprep.subr.mxu0 0.0
    %146 = vmatpush1.msra.mxu0 0.0
    %147 = vmatprep.subr.mxu0 0.0
    %148 = vmatpush1.msra.mxu0 0.0
    %149 = vmatprep.subr.mxu0 0.0
    %150 = vmatpush1.msra.mxu0 0.0
    %151 = vmatprep.subr.mxu0 0.0
    %152 = vmatpush1.msra.mxu0 0.0
    %153 = vmatprep.subr.mxu0 0.0
    %154 = vmatpush1.msra.mxu0 0.0
    %155 = vmatprep.subr.mxu0 0.0
    %156 = vmatpush1.msra.mxu0 0.0
    %157 = vmatprep.subr.mxu0 0.0
    %158 = vmatpush1.msra.mxu0 0.0
    %159 = vmatprep.subr.mxu0 0.0
    %160 = vmatpush1.msra.mxu0 0.0
    %161 = vmatprep.subr.mxu0 0.0
    %162 = vmatpush1.msra.mxu0 0.0
    %163 = vmatprep.subr.mxu0 0.0
    %164 = vmatpush1.msra.mxu0 0.0
    %165 = vmatprep.subr.mxu0 0.0
    %166 = vmatpush1.msra.mxu0 0.0
    %167 = vmatprep.subr.mxu0 0.0
    %168 = vmatpush1.msra.mxu0 0.0
    %169 = vmatprep.subr.mxu0 0.0
    %170 = vmatpush1.msra.mxu0 0.0
    %171 = vmatprep.subr.mxu0 0.0
    %172 = vmatpush1.msra.mxu0 0.0
    %173 = vmatprep.subr.mxu0 0.0
    %174 = vmatpush1.msra.mxu0 0.0
    %175 = vmatprep.subr.mxu0 0.0
    %176 = vmatpush1.msra.mxu0 0.0
    %177 = vmatprep.subr.mxu0 0.0
    %178 = vmatpush1.msra.mxu0 0.0
    %179 = vmatprep.subr.mxu0 0.0
    %180 = vmatpush1.msra.mxu0 0.0
    %181 = vmatprep.subr.mxu0 0.0
    %182 = vmatpush1.msra.mxu0 0.0
    %183 = vmatprep.subr.mxu0 0.0
    %184 = vmatpush1.msra.mxu0 0.0
    %185 = vmatprep.subr.mxu0 0.0
    %186 = vmatpush1.msra.mxu0 0.0
    %187 = vmatprep.subr.mxu0 0.0
    %188 = vmatpush1.msra.mxu0 0.0
    %189 = vmatprep.subr.mxu0 0.0
    %190 = vmatpush1.msra.mxu0 0.0
    %191 = vmatprep.subr.mxu0 0.0
    %192 = vmatpush1.msra.mxu0 0.0
    %193 = vmatprep.subr.mxu0 0.0
    %194 = vmatpush1.msra.mxu0 0.0
    %195 = vmatprep.mubr.f32.mxu0 0.0
    %196 = vmatmul.mubr.f32.gmra.mrb[0].mxu0 %v125
    %v197 = vpop.f32.mrb[0].mxu0
    %v198 = vadd.f32 0.0, %v197
    %v199 = vpop.f32.mrb[0].mxu0
    %200 = vdwg.mxu0
    %201 = vst [vmem:[#allocation5] sm:$0xff] %v198
    // Predicated region
    $region22: #{tpu_custom_call.1} parent=1 // pred_check
      _
    $region23: #{tpu_custom_call.1} parent=1 // pred_check_branch
      %203 = sbr.rel (0) target = $region25
    $region24: #{tpu_custom_call.1} parent=1 // pred_region
      %s205 = ssub.s32 128, 128
      %206 = vsyncadd [#allocation4], %s205
      %s208 = sshll.u32 [#allocation5], 4
      %s209 = int_to_ptr.vmem [resolvable:$true] %s208
      %211 = dma.vmem_to_hbm [thread:$0]  %s209, 128, %s4, [#allocation4]
    $region25: #{tpu_custom_call.1} parent=1 // pred_fallthru
      _
    // Predicated region
    $region26: #{tpu_custom_call.1} parent=1 // pred_check
      _
    $region27: #{tpu_custom_call.1} parent=1 // pred_check_branch
      %213 = sbr.rel (0) target = $region29
    $region28: #{tpu_custom_call.1} parent=1 // pred_region
      %214 = dma.done [#allocation4], 128
    $region29: #{tpu_custom_call.1} parent=1 // pred_fallthru
      _
    %215 = vsyncpa [#allocation3], 1
    %216 = vsyncpa [#allocation4], 1

</llo_original>
